<compile_context>
chip_gen: v7x
topology: tpu7x:2x2x1
jax: 0.10.0
libtpu: 0.0.40
codegen_flags: <defaults>
</compile_context>

<pallas_src>
from functools import partial

import jax
import jax.numpy as jnp
import numpy as np
from jax.experimental import pallas as pl
from jax.experimental.pallas import tpu as pltpu

LANES = 1024           # lane-dense last dim (8 x 128): full-width unmasked vst, few large DMAs
MAX_BLOCK_ROWS = 1024  # (1024, 1024) f32 block = 4 MiB per stream (24 MiB total double-buffered)
VMEM_LIMIT_BYTES = 40 * 1024 * 1024  # safe on v5e/v6e (128 MiB phys) and v7x (64 MiB phys)


def _ema_kernel(omd_ref, shadow_ref, param_ref, out_ref):
    """Elementwise EMA hot path: out = shadow - (1 - decay) * (shadow - param)."""
    omd = omd_ref[0, 0]                         # scalar one_minus_decay, lives in SMEM
    s = shadow_ref[...]
    p = param_ref[...].astype(jnp.float32)      # param slab may be bf16; upcast is free (DMA-bound)
    out_ref[...] = s - omd * (s - p)


def _padded_geometry(total_elems, max_block_rows=MAX_BLOCK_ROWS):
    """Pick (rows, block_rows) for a flat length with minimal padding.

    Rows are padded to a multiple of 8 (sublane); block_rows is chosen adaptively
    (largest <= max_block_rows that keeps the grid dividing evenly), so padding
    waste is at most a handful of rows rather than a full block.
    """
    rows = -(-total_elems // LANES)
    rows = -(-rows // 8) * 8
    if rows <= max_block_rows:
        return rows, rows                       # single block, no extra padding
    n_blocks = -(-rows // max_block_rows)
    block_rows = -(-rows // n_blocks)
    block_rows = -(-block_rows // 8) * 8
    rows = n_blocks * block_rows
    return rows, block_rows


def _pack_leaves(leaves, rows, dtype=jnp.float32):
    """Concat flattened leaves into a zero-padded (rows, LANES) slab."""
    flats = [jnp.ravel(jnp.asarray(p)).astype(dtype) for p in leaves]
    flat = jnp.concatenate(flats)
    flat = jnp.pad(flat, (0, rows * LANES - flat.shape[0]))
    return flat.reshape(rows, LANES)


def ema_update_packed(one_minus_decay, shadow_slab, param_slab, *, block_rows):
    """Run the Pallas EMA kernel on packed (rows, LANES) slabs; shadow updated in place."""
    rows, lanes = shadow_slab.shape
    return pl.pallas_call(
        _ema_kernel,
        out_shape=jax.ShapeDtypeStruct((rows, lanes), jnp.float32),
        grid=(rows // block_rows,),
        in_specs=[
            pl.BlockSpec(memory_space=pltpu.MemorySpace.SMEM),       # (1,1) one_minus_decay
            pl.BlockSpec((block_rows, lanes), lambda i: (i, 0)),     # shadow
            pl.BlockSpec((block_rows, lanes), lambda i: (i, 0)),     # params
        ],
        out_specs=pl.BlockSpec((block_rows, lanes), lambda i: (i, 0)),
        # Inputs: 0 = omd scalar, 1 = shadow slab, 2 = param slab. Alias shadow -> output.
        input_output_aliases={1: 0},
        compiler_params=pltpu.CompilerParams(
            dimension_semantics=("parallel",),        # lets v7x's 2 TCs split the streaming grid
            vmem_limit_bytes=VMEM_LIMIT_BYTES,
        ),
    )(one_minus_decay, shadow_slab, param_slab)


@partial(jax.jit,
         static_argnames=("decay", "use_num_updates", "block_rows"),
         donate_argnames=("shadow_slab",))
def _ema_step(num_updates, shadow_slab, param_slab, *, decay, use_num_updates, block_rows):
    """One EMA step, entirely on device: decay schedule + in-place shadow update."""
    if use_num_updates:
        num_updates = num_updates + 1
        n = num_updates.astype(jnp.float32)
        decay_eff = jnp.minimum(jnp.float32(decay), (1.0 + n) / (10.0 + n))
    else:
        decay_eff = jnp.float32(decay)
    one_minus_decay = jnp.reshape(1.0 - decay_eff, (1, 1)).astype(jnp.float32)
    new_shadow = ema_update_packed(one_minus_decay, shadow_slab, param_slab,
                                   block_rows=block_rows)
    return num_updates, new_shadow


class LitEmaJax:
    """JAX/Pallas port of LitEma (forward pass only).

    The shadow is stored permanently as a single packed (rows, 1024) f32 slab. The hot path
    (`forward_packed`) consumes a pre-packed param slab so the kernel streams exactly
    3N bytes/step (read shadow + read params + write shadow). `pack_params` is meant to be
    called once by the training loop (which should keep its params packed); `forward(dict)`
    is a convenience path that packs on the fly.
    """

    def __init__(self, model_params, decay=0.9999, use_num_updates=True):
        if decay < 0.0 or decay > 1.0:
            raise ValueError("Decay must be between 0 and 1")
        self.decay = float(decay)
        self.use_num_updates = bool(use_num_updates)
        self.num_updates = jnp.asarray(0 if use_num_updates else -1, dtype=jnp.int32)

        self.names = sorted(model_params.keys())
        self.shapes = {k: tuple(model_params[k].shape) for k in self.names}
        self.sizes = {k: int(np.prod(self.shapes[k], dtype=np.int64)) for k in self.names}
        total = sum(self.sizes[k] for k in self.names)
        self.rows, self.block_rows = _padded_geometry(total)

        # Shadow buffers = clone of model params, stored packed as f32.
        self.shadow_slab = self.pack_params(model_params)
        # TODO(synk): store()/restore()/copy_to() are host-side bookkeeping, not kernels.

    def pack_params(self, param_dict, dtype=jnp.float32):
        """Pack the named params into a (rows, LANES) slab. Call once; keep params packed."""
        return _pack_leaves([param_dict[k] for k in self.names], self.rows, dtype=dtype)

    def forward_packed(self, param_slab):
        """EMA update from a pre-packed param slab (no repacking in the hot path)."""
        self.num_updates, self.shadow_slab = _ema_step(
            self.num_updates, self.shadow_slab, param_slab,
            decay=self.decay, use_num_updates=self.use_num_updates,
            block_rows=self.block_rows)
        return self.shadow_slab

    def forward(self, model_params):
        """Convenience path from a name->array dict (packs every call; prefer forward_packed)."""
        return self.forward_packed(self.pack_params(model_params))

    def shadow_dict(self):
        """Unpack the packed shadow slab into the original named tensors."""
        flat = self.shadow_slab.reshape(-1)
        out, off = {}, 0
        for k in self.names:
            sz = self.sizes[k]
            out[k] = flat[off:off + sz].reshape(self.shapes[k])
            off += sz
        return out


if __name__ == "__main__":
    key = jax.random.PRNGKey(0)
    k1, k2, k3, k4, k5 = jax.random.split(key, 5)

    # Synthetic "model": a small conv layer (OIHW weights) + a linear layer.
    model_params = {
        "conv.weight": jax.random.normal(k1, (4, 4, 3, 3), jnp.float32),
        "conv.bias": jax.random.normal(k2, (4,), jnp.float32),
        "linear.weight": jax.random.normal(k3, (32, 16), jnp.float32),
        "linear.bias": jax.random.normal(k4, (32,), jnp.float32),
    }

    ema = LitEmaJax(model_params, decay=0.9999, use_num_updates=True)

    # Training-loop-side packed view of the params: packed ONCE, kept packed across steps,
    # so every EMA step consumes it directly (no per-step repack).
    param_slab = ema.pack_params(model_params)

    # Pure-numpy reference of the slab-space EMA over 3 steps (also exercises in-place alias).
    ref_shadow = np.array(ema.shadow_slab, dtype=np.float32)
    n_steps = 3
    for step in range(n_steps):
        noise = 0.05 * jax.random.normal(jax.random.fold_in(k5, step),
                                         param_slab.shape, jnp.float32)
        param_slab = param_slab + noise          # simulated optimizer update, stays packed
        ema.forward_packed(param_slab)

        n = step + 1
        d = min(0.9999, (1 + n) / (10 + n))
        p_np = np.asarray(param_slab, dtype=np.float32)
        ref_shadow = ref_shadow - (1.0 - d) * (ref_shadow - p_np)

    jax.block_until_ready(ema.shadow_slab)

    ok = bool(np.allclose(np.asarray(ema.shadow_slab), ref_shadow, rtol=1e-5, atol=1e-5))

    # Also verify the named unpack path against the per-leaf reference.
    shadow_named = ema.shadow_dict()
    flat_ref = ref_shadow.reshape(-1)
    off = 0
    for k in ema.names:
        sz = ema.sizes[k]
        ok &= bool(np.allclose(np.asarray(shadow_named[k]),
                               flat_ref[off:off + sz].reshape(ema.shapes[k]),
                               rtol=1e-5, atol=1e-5))
        off += sz

    assert ok, "EMA kernel output mismatch vs reference"
    print("KERNEL_OK")
</pallas_src>

<mosaic_0001>
module attributes {stable_mosaic.version = 11 : i64} {
  func.func @_ema_kernel(%arg0: i32, %arg1: memref<1x1xf32, #tpu.memory_space<smem>>, %arg2: memref<8x1024xf32, #tpu.memory_space<vmem>>, %arg3: memref<8x1024xf32, #tpu.memory_space<vmem>>, %arg4: memref<8x1024xf32, #tpu.memory_space<vmem>>) attributes {dimension_semantics = [#tpu.dimension_semantics<parallel>], iteration_bounds = array<i64: 1>, scalar_prefetch = 0 : i64, scratch_operands = 0 : i64, tpu.core_type = #tpu.core_type<tc>, window_params = [{transform_indices = @transform_0, window_bounds = array<i64: 1, 1>}, {transform_indices = @transform_1, window_bounds = array<i64: 8, 1024>}, {transform_indices = @transform_2, window_bounds = array<i64: 8, 1024>}, {transform_indices = @transform_3, window_bounds = array<i64: 8, 1024>}]} {
    %c0 = arith.constant 0 : index
    %c0_0 = arith.constant 0 : index
    %0 = memref.load %arg1[%c0, %c0_0] : memref<1x1xf32, #tpu.memory_space<smem>>
    %c0_1 = arith.constant 0 : index
    %c0_2 = arith.constant 0 : index
    %1 = vector.load %arg2[%c0_1, %c0_2] : memref<8x1024xf32, #tpu.memory_space<vmem>>, vector<8x1024xf32>
    %c0_3 = arith.constant 0 : index
    %c0_4 = arith.constant 0 : index
    %2 = vector.load %arg3[%c0_3, %c0_4] : memref<8x1024xf32, #tpu.memory_space<vmem>>, vector<8x1024xf32>
    %3 = arith.subf %1, %2 : vector<8x1024xf32>
    %4 = vector.broadcast %0 : f32 to vector<8x1024xf32>
    %5 = arith.mulf %4, %3 : vector<8x1024xf32>
    %6 = arith.subf %1, %5 : vector<8x1024xf32>
    %c0_5 = arith.constant 0 : index
    %c0_6 = arith.constant 0 : index
    %7 = vector.load %arg4[%c0_5, %c0_6] : memref<8x1024xf32, #tpu.memory_space<vmem>>, vector<8x1024xf32>
    tpu.vector_store %arg4[%c0_5, %c0_6], %6 {strides = array<i32>} : memref<8x1024xf32, #tpu.memory_space<vmem>>, vector<8x1024xf32>,
    return
  }
  func.func @transform_0(%arg0: i32) -> (i32, i32) {
    %c0_i32 = arith.constant 0 : i32
    %c0_i32_0 = arith.constant 0 : i32
    %c0_i32_1 = arith.constant 0 : i32
    return %c0_i32, %c0_i32_0 : i32, i32
  }
  func.func @transform_1(%arg0: i32) -> (i32, i32) {
    %c0_i32 = arith.constant 0 : i32
    %c0_i32_0 = arith.constant 0 : i32
    return %arg0, %c0_i32 : i32, i32
  }
  func.func @transform_2(%arg0: i32) -> (i32, i32) {
    %c0_i32 = arith.constant 0 : i32
    %c0_i32_0 = arith.constant 0 : i32
    return %arg0, %c0_i32 : i32, i32
  }
  func.func @transform_3(%arg0: i32) -> (i32, i32) {
    %c0_i32 = arith.constant 0 : i32
    %c0_i32_0 = arith.constant 0 : i32
    return %arg0, %c0_i32 : i32, i32
  }
}

</mosaic_0001>

<llo_original>
// kernel: _ema_step.1
$region0: #{_ema_step.1}
  #allocation0 [shape = 'u32[]', space=smem, size = 0x4, offset = 0x4, fixed_abs, tag = 'smem constant byte address 0x4 - core index']
  #allocation1 [shape = 'u32[144,128]{1,0:T(1,128)}', space=vmem, size = 0x12000, scoped, tag = 'internal scratch']
  #allocation2 [shape = 'f32[1,1]{1,0:T(1,128)S(6)}', space=smem, size = 0x200, scoped, tag = 'scoped memory for _ema_step.1']
  %s0 = inlined_call_operand.<no memory space> [shape: f32[1,1], index: 0, kind: input, shape index: {}]
  %s1 = inlined_call_operand.hbm [shape: f32[8,1024], index: 1, kind: input, shape index: {}, may-alias: {1,3}]
  %s2 = inlined_call_operand.hbm [shape: f32[8,1024], index: 2, kind: input, shape index: {}]
  %s3 = inlined_call_operand.hbm [shape: f32[8,1024], index: 3, kind: output, shape index: {}, may-alias: {1,3}]
  %s4 = sld [smem:[#allocation0]]
  $region30: #{_ema_step.1} parent=0
    _
  %s6 = ssub.s32 1, %s4
  %s7 = scalar_select 0, %s6, %s4
  %8 = sst [smem:[#allocation2]] %s0
  $region1: #{_ema_step.1} parent=0
    #allocation3 [shape = 'u8[32768]{0}', space=vmem, size = 0x8000, scoped, tag = 'input window, operand 1, single buffered']
    #allocation4 [shape = 's32[1]{0}', space=sflag, size = 0x4, scoped, tag = 'scoped memory for _ema_step.1']
    #allocation5 [shape = 's32[1]{0}', space=sflag, size = 0x4, scoped, tag = 'scoped memory for _ema_step.1']
    #allocation6 [shape = 'u8[32768]{0}', space=vmem, size = 0x8000, scoped, tag = 'input window, operand 2, single buffered']
    #allocation7 [shape = 's32[1]{0}', space=sflag, size = 0x4, scoped, tag = 'scoped memory for _ema_step.1']
    #allocation8 [shape = 'u8[32768]{0}', space=vmem, size = 0x8000, scoped, tag = 'output window, operand 0, single buffered']
    %9 = vsyncpa [#allocation4], 0
    %10 = vsyncpa [#allocation7], 0
    %11 = vsyncpa [#allocation5], 0
    // Predicated region
    $region2: #{_ema_step.1} parent=1 // pred_check
      _
    $region3: #{_ema_step.1} parent=1 // pred_check_branch
      %13 = sbr.rel (0) target = $region5
    $region4: #{_ema_step.1} parent=1 // pred_region
      _
    $region5: #{_ema_step.1} parent=1 // pred_fallthru
      _
    // Predicated region
    $region6: #{_ema_step.1} parent=1 // pred_check
      _
    $region7: #{_ema_step.1} parent=1 // pred_check_branch
      %15 = sbr.rel (0) target = $region9
    $region8: #{_ema_step.1} parent=1 // pred_region
      %s17 = ssub.s32 1024, 1024
      %18 = vsyncadd [#allocation4], %s17
      %s20 = sshll.u32 [#allocation3], 4
      %s21 = int_to_ptr.vmem [resolvable:$true] %s20
      %23 = dma.hbm_to_vmem [thread:$0]  %s1, 1024, %s21, [#allocation4]
    $region9: #{_ema_step.1} parent=1 // pred_fallthru
      _
    // Predicated region
    $region10: #{_ema_step.1} parent=1 // pred_check
      _
    $region11: #{_ema_step.1} parent=1 // pred_check_branch
      %25 = sbr.rel (0) target = $region13
    $region12: #{_ema_step.1} parent=1 // pred_region
      %s27 = ssub.s32 1024, 1024
      %28 = vsyncadd [#allocation7], %s27
      %s30 = sshll.u32 [#allocation6], 4
      %s31 = int_to_ptr.vmem [resolvable:$true] %s30
      %33 = dma.hbm_to_vmem [thread:$0]  %s2, 1024, %s31, [#allocation7]
    $region13: #{_ema_step.1} parent=1 // pred_fallthru
      _
    // Predicated region
    $region14: #{_ema_step.1} parent=1 // pred_check
      _
    $region15: #{_ema_step.1} parent=1 // pred_check_branch
      %35 = sbr.rel (0) target = $region17
    $region16: #{_ema_step.1} parent=1 // pred_region
      %36 = dma.done [#allocation4], 1024
    $region17: #{_ema_step.1} parent=1 // pred_fallthru
      _
    // Predicated region
    $region18: #{_ema_step.1} parent=1 // pred_check
      _
    $region19: #{_ema_step.1} parent=1 // pred_check_branch
      %38 = sbr.rel (0) target = $region21
    $region20: #{_ema_step.1} parent=1 // pred_region
      %39 = dma.done [#allocation7], 1024
    $region21: #{_ema_step.1} parent=1 // pred_fallthru
      _
    %s40 = sld [smem:[#allocation2]]
    %v41 = vld [vmem:[#allocation3] sm:$0xff]
    %v42 = vld [vmem:[#allocation3 + $0x8] sm:$0xff]
    %v43 = vld [vmem:[#allocation3 + $0x10] sm:$0xff]
    %v44 = vld [vmem:[#allocation3 + $0x18] sm:$0xff]
    %v45 = vld [vmem:[#allocation3 + $0x20] sm:$0xff]
    %v46 = vld [vmem:[#allocation3 + $0x28] sm:$0xff]
    %v47 = vld [vmem:[#allocation3 + $0x30] sm:$0xff]
    %v48 = vld [vmem:[#allocation3 + $0x38] sm:$0xff]
    %v49 = vld [vmem:[#allocation6] sm:$0xff]
    %v50 = vld [vmem:[#allocation6 + $0x8] sm:$0xff]
    %v51 = vld [vmem:[#allocation6 + $0x10] sm:$0xff]
    %v52 = vld [vmem:[#allocation6 + $0x18] sm:$0xff]
    %v53 = vld [vmem:[#allocation6 + $0x20] sm:$0xff]
    %v54 = vld [vmem:[#allocation6 + $0x28] sm:$0xff]
    %v55 = vld [vmem:[#allocation6 + $0x30] sm:$0xff]
    %v56 = vld [vmem:[#allocation6 + $0x38] sm:$0xff]
    %v57 = vsub.f32 %v41, %v49
    %v58 = vsub.f32 %v42, %v50
    %v59 = vsub.f32 %v43, %v51
    %v60 = vsub.f32 %v44, %v52
    %v61 = vsub.f32 %v45, %v53
    %v62 = vsub.f32 %v46, %v54
    %v63 = vsub.f32 %v47, %v55
    %v64 = vsub.f32 %v48, %v56
    %v65 = vstv %s40
    %v66 = vmul.f32 %v65, %v57
    %v67 = vmul.f32 %v65, %v58
    %v68 = vmul.f32 %v65, %v59
    %v69 = vmul.f32 %v65, %v60
    %v70 = vmul.f32 %v65, %v61
    %v71 = vmul.f32 %v65, %v62
    %v72 = vmul.f32 %v65, %v63
    %v73 = vmul.f32 %v65, %v64
    %v74 = vsub.f32 %v41, %v66
    %v75 = vsub.f32 %v42, %v67
    %v76 = vsub.f32 %v43, %v68
    %v77 = vsub.f32 %v44, %v69
    %v78 = vsub.f32 %v45, %v70
    %v79 = vsub.f32 %v46, %v71
    %v80 = vsub.f32 %v47, %v72
    %v81 = vsub.f32 %v48, %v73
    %82 = vst [vmem:[#allocation8] sm:$0xff] %v74
    %83 = vst [vmem:[#allocation8 + $0x8] sm:$0xff] %v75
    %84 = vst [vmem:[#allocation8 + $0x10] sm:$0xff] %v76
    %85 = vst [vmem:[#allocation8 + $0x18] sm:$0xff] %v77
    %86 = vst [vmem:[#allocation8 + $0x20] sm:$0xff] %v78
    %87 = vst [vmem:[#allocation8 + $0x28] sm:$0xff] %v79
    %88 = vst [vmem:[#allocation8 + $0x30] sm:$0xff] %v80
    %89 = vst [vmem:[#allocation8 + $0x38] sm:$0xff] %v81
    // Predicated region
    $region22: #{_ema_step.1} parent=1 // pred_check
      _
    $region23: #{_ema_step.1} parent=1 // pred_check_branch
      %91 = sbr.rel (0) target = $region25
    $region24: #{_ema_step.1} parent=1 // pred_region
      %s93 = ssub.s32 1024, 1024
      %94 = vsyncadd [#allocation5], %s93
      %s96 = sshll.u32 [#allocation8], 4
      %s97 = int_to_ptr.vmem [resolvable:$true] %s96
      %99 = dma.vmem_to_hbm [thread:$0]  %s97, 1024, %s3, [#allocation5]
    $region25: #{_ema_step.1} parent=1 // pred_fallthru
      _
    // Predicated region
    $region26: #{_ema_step.1} parent=1 // pred_check
      _
    $region27: #{_ema_step.1} parent=1 // pred_check_branch
      %101 = sbr.rel (0) target = $region29
    $region28: #{_ema_step.1} parent=1 // pred_region
      %102 = dma.done [#allocation5], 1024
    $region29: #{_ema_step.1} parent=1 // pred_fallthru
      _
    %103 = vsyncpa [#allocation4], 1
    %104 = vsyncpa [#allocation7], 1
    %105 = vsyncpa [#allocation5], 1

</llo_original>
